<compile_context>
chip_gen: v7x
topology: tpu7x:2x2x1
jax: 0.10.0
libtpu: 0.0.40
codegen_flags: <defaults>
</compile_context>

<pallas_src>
import jax
import jax.numpy as jnp
from jax.experimental import pallas as pl
from jax.experimental.pallas import tpu as pltpu


def _round_up(v, m):
    return (v + m - 1) // m * m


def _divisors(dim, mult):
    """Divisors of `dim` that are multiples of `mult` (ascending), always
    including `dim` itself (a full-extent block is legal regardless)."""
    opts = [d for d in range(mult, dim + 1, mult) if dim % d == 0]
    if dim not in opts:
        opts.append(dim)
    return sorted(opts)


def _largest_leq(options, cap):
    fitting = [o for o in options if o <= cap]
    return max(fitting) if fitting else min(options)


def _vmem_limit_bytes():
    """Scoped-VMEM limit derived from the actual chip, with ~25% headroom for
    compiler-internal scratch.  Falls back to a conservative 48 MiB."""
    cap = None
    try:
        cap = getattr(pltpu.get_tpu_info(), "vmem_capacity_bytes", None)
    except Exception:
        cap = None
    if not cap:
        cap = 64 * 1024 * 1024
    return int(cap) * 3 // 4


def _choose_tiles(N, C, HW, Kp, x_itemsize, w_itemsize, vmem_budget,
                  x_buf_cap=16 * 1024 * 1024):
    """Pick (tn, tc, thw) block sizes.

    tn : batch tile; also the sublane dim of the (tn, Kp) output block, so it
         is a multiple of 8 (or the full N).  Capped at N//2 so grid[0] >= 2
         (engages both v7x TensorCores).
    tc : channel tile — sublane dim of the x block (dtype-aware granularity).
    thw: spatial tile — lane dim of the x block (multiple of 128 or full HW).
    Maximizes the x block under the VMEM budget; jointly shrinks tn when even
    the smallest (tc, thw) block does not fit (fixes the 7x7 ResNet-head case).
    """
    sub_mult = {4: 8, 2: 16, 1: 32}.get(x_itemsize, 8)
    tn_opts = _divisors(N, 8)
    tc_opts = _divisors(C, sub_mult)
    thw_opts = _divisors(HW, 128)

    tn_cap = min(128, N // 2) if N >= 16 else N
    tn_pref = _largest_leq(tn_opts, tn_cap)

    def vmem_bytes(tn, tc, thw):
        x_blk = tn * tc * thw * x_itemsize
        w_blk = tc * Kp * w_itemsize
        o_blk = tn * Kp * 4
        b_blk = Kp * 4
        scratch = tn * tc * 4 + tn * Kp * 4
        return 2 * (x_blk + w_blk + o_blk + b_blk) + scratch

    def fits(tn, tc, thw):
        return (vmem_bytes(tn, tc, thw) <= vmem_budget
                and tn * tc * thw * x_itemsize <= x_buf_cap)

    tn_order = [tn_pref] + sorted((t for t in tn_opts if t < tn_pref),
                                  reverse=True)
    for tn in tn_order:
        best = None
        for tc in tc_opts:
            for thw in thw_opts:
                if fits(tn, tc, thw):
                    key = (tc * thw, thw)
                    if best is None or key > best[0]:
                        best = (key, tc, thw)
        if best is not None:
            return tn, best[1], best[2]
    # Nothing fits even at minimal tiles: fall back and let the compiler cope.
    return tn_opts[0], tc_opts[0], thw_opts[0]


def _classifier_kernel(x_ref, w_ref, b_ref, o_ref, pooled_ref, logits_ref):
    # x_ref      : [TN, TC, THW]  native-layout activations (no pre-pass)
    # w_ref      : [TC, Kp]       weight slice, 1/HW pooling scale pre-folded
    # b_ref      : [1, Kp]        f32 bias
    # o_ref      : [TN, Kp]       lane-dense padded output
    # pooled_ref : [TN, TC]       f32 partial spatial sum (over the HW axis)
    # logits_ref : [TN, Kp]       f32 running matmul accumulator (over C)
    c = pl.program_id(1)
    h = pl.program_id(2)
    nc = pl.num_programs(1)
    nh = pl.num_programs(2)

    @pl.when(jnp.logical_and(c == 0, h == 0))
    def _init_logits():
        logits_ref[...] = jnp.zeros_like(logits_ref)

    @pl.when(h == 0)
    def _init_pooled():
        pooled_ref[...] = jnp.zeros_like(pooled_ref)

    # Partial global-average pool: f32 sum over the spatial (lane) axis.
    pooled_ref[...] += jnp.sum(x_ref[...].astype(jnp.float32), axis=-1)

    @pl.when(h == nh - 1)
    def _accumulate_logits():
        logits_ref[...] += jnp.dot(
            pooled_ref[...], w_ref[...].astype(jnp.float32),
            preferred_element_type=jnp.float32)  # MXU

    @pl.when(jnp.logical_and(c == nc - 1, h == nh - 1))
    def _finalize():
        o_ref[...] = (logits_ref[...] + b_ref[...]).astype(o_ref.dtype)


def classifier_forward(x, weight, bias, shape=None, *,
                       weight_dtype=jnp.float32,
                       tile_n=None, tile_c=None, tile_hw=None):
    """Classifier default ("cls") branch: AdaptiveAvgPool2d(1) + Linear.

    x: [N, C, H, W]; weight: [K, C] (PyTorch nn.Linear layout); bias: [K].
    `shape` is accepted for API parity with Classifier.forward but unused in
    the default branch.  `weight_dtype=jnp.bfloat16` halves the weight's VMEM
    footprint (the dot still accumulates in f32)."""
    del shape
    N, C, H, W = x.shape
    K = weight.shape[0]
    HW = H * W
    out_dtype = jnp.result_type(x.dtype, weight.dtype)

    # Free metadata reshape — x is consumed in its native NCHW layout.
    x3 = x.reshape(N, C, HW)

    # Lane-dense padded output width; fold 1/HW pooling scale into w once.
    Kp = _round_up(max(K, 1), 128)
    w_p = jnp.zeros((C, Kp), jnp.float32)
    w_p = w_p.at[:, :K].set(
        jnp.transpose(weight).astype(jnp.float32) / float(HW))
    w_p = w_p.astype(weight_dtype)
    b_p = jnp.zeros((1, Kp), jnp.float32).at[:, :K].set(
        bias.astype(jnp.float32))

    vmem_limit = _vmem_limit_bytes()
    x_item = jnp.dtype(x.dtype).itemsize
    w_item = jnp.dtype(weight_dtype).itemsize
    tn, tc, thw = _choose_tiles(N, C, HW, Kp, x_item, w_item,
                                vmem_budget=int(vmem_limit * 0.9))
    if tile_n is not None:
        tn = tile_n
    if tile_c is not None:
        tc = tile_c
    if tile_hw is not None:
        thw = tile_hw
    assert N % tn == 0 and C % tc == 0 and HW % thw == 0, \
        (N, C, HW, tn, tc, thw)

    grid = (N // tn, C // tc, HW // thw)

    out = pl.pallas_call(
        _classifier_kernel,
        out_shape=jax.ShapeDtypeStruct((N, Kp), out_dtype),
        grid_spec=pltpu.PrefetchScalarGridSpec(
            num_scalar_prefetch=0,
            grid=grid,
            in_specs=[
                pl.BlockSpec((tn, tc, thw), lambda i, c, h: (i, c, h)),  # x
                pl.BlockSpec((tc, Kp), lambda i, c, h: (c, 0)),          # w
                pl.BlockSpec((1, Kp), lambda i, c, h: (0, 0)),           # b
            ],
            out_specs=pl.BlockSpec((tn, Kp), lambda i, c, h: (i, 0)),
            scratch_shapes=[
                pltpu.VMEM((tn, tc), jnp.float32),   # pooled partial sums
                pltpu.VMEM((tn, Kp), jnp.float32),   # logits accumulator
            ],
        ),
        compiler_params=pltpu.CompilerParams(
            dimension_semantics=("parallel", "arbitrary", "arbitrary"),
            vmem_limit_bytes=vmem_limit,
        ),
    )(x3, w_p, b_p)
    return out[:, :K]


def _reference(x, weight, bias):
    pooled = jnp.mean(x.astype(jnp.float32), axis=(2, 3))
    return pooled @ jnp.transpose(weight).astype(jnp.float32) + bias


if __name__ == "__main__":
    key = jax.random.PRNGKey(0)
    k_x, k_w, k_b, k_x2, k_w2, k_b2 = jax.random.split(key, 6)

    # Small shapes consistent with the module: batch=2, channels=4, spatial=16.
    N, C, H, W = 2, 4, 16, 16
    num_classes = 8

    x = jax.random.normal(k_x, (N, C, H, W), dtype=jnp.float32)
    bound = 1.0 / float(C) ** 0.5
    weight = jax.random.uniform(k_w, (num_classes, C), jnp.float32,
                                -bound, bound)
    bias = jax.random.uniform(k_b, (num_classes,), jnp.float32, -bound, bound)

    out = jax.block_until_ready(
        classifier_forward(x, weight, bias, shape=(H, W)))
    ref = _reference(x, weight, bias)
    assert out.shape == (N, num_classes)
    assert jnp.allclose(out, ref, atol=1e-4, rtol=1e-4), \
        "default-tile path mismatch"

    # Force multi-step C and HW reduction grids (grid = (1, 2, 2)) so both
    # pl.when accumulators (pooled over HW, logits over C) are exercised.
    N2, C2 = 2, 16
    x2 = jax.random.normal(k_x2, (N2, C2, H, W), dtype=jnp.float32)
    bound2 = 1.0 / float(C2) ** 0.5
    w2 = jax.random.uniform(k_w2, (num_classes, C2), jnp.float32,
                            -bound2, bound2)
    b2 = jax.random.uniform(k_b2, (num_classes,), jnp.float32,
                            -bound2, bound2)
    out2 = jax.block_until_ready(
        classifier_forward(x2, w2, b2, shape=(H, W), tile_c=8, tile_hw=128))
    ref2 = _reference(x2, w2, b2)
    assert jnp.allclose(out2, ref2, atol=1e-4, rtol=1e-4), \
        "multi-step reduction path mismatch"

    print("KERNEL_OK")
</pallas_src>

<mosaic_0001>
module attributes {stable_mosaic.version = 11 : i64} {
  func.func @_classifier_kernel(%arg0: i32, %arg1: i32, %arg2: i32, %arg3: memref<2x4x256xf32, #tpu.memory_space<vmem>>, %arg4: memref<4x128xf32, #tpu.memory_space<vmem>>, %arg5: memref<1x128xf32, #tpu.memory_space<vmem>>, %arg6: memref<2x128xf32, #tpu.memory_space<vmem>>, %arg7: memref<2x4xf32, #tpu.memory_space<vmem>>, %arg8: memref<2x128xf32, #tpu.memory_space<vmem>>) attributes {dimension_semantics = [#tpu.dimension_semantics<parallel>, #tpu.dimension_semantics<arbitrary>, #tpu.dimension_semantics<arbitrary>], iteration_bounds = array<i64: 1, 1, 1>, scalar_prefetch = 0 : i64, scratch_operands = 2 : i64, tpu.core_type = #tpu.core_type<tc>, window_params = [{transform_indices = @transform_0, window_bounds = array<i64: 2, 4, 256>}, {transform_indices = @transform_1, window_bounds = array<i64: 4, 128>}, {pipeline_mode = #tpu.pipeline_mode<synchronous>, transform_indices = @transform_2, window_bounds = array<i64: 1, 128>}, {transform_indices = @transform_3, window_bounds = array<i64: 2, 128>}]} {
    %c0_i32 = arith.constant 0 : i32
    %0 = arith.cmpi eq, %arg1, %c0_i32 : i32
    %c0_i32_0 = arith.constant 0 : i32
    %1 = arith.cmpi eq, %arg2, %c0_i32_0 : i32
    %2 = arith.andi %0, %1 : i1
    %3 = arith.extui %2 : i1 to i32
    %c0_i32_1 = arith.constant 0 : i32
    %4 = arith.cmpi ne, %3, %c0_i32_1 : i32
    scf.if %4 {
      %cst_15 = arith.constant 0.000000e+00 : f32
      %21 = vector.broadcast %cst_15 : f32 to vector<2x128xf32>
      %c0_16 = arith.constant 0 : index
      %c0_17 = arith.constant 0 : index
      %22 = vector.load %arg8[%c0_16, %c0_17] : memref<2x128xf32, #tpu.memory_space<vmem>>, vector<2x128xf32>
      tpu.vector_store %arg8[%c0_16, %c0_17], %21 {strides = array<i32>} : memref<2x128xf32, #tpu.memory_space<vmem>>, vector<2x128xf32>,
    } else {
    }
    %c0_i32_2 = arith.constant 0 : i32
    %5 = arith.cmpi eq, %arg2, %c0_i32_2 : i32
    %6 = arith.extui %5 : i1 to i32
    %c0_i32_3 = arith.constant 0 : i32
    %7 = arith.cmpi ne, %6, %c0_i32_3 : i32
    scf.if %7 {
      %cst_15 = arith.constant 0.000000e+00 : f32
      %21 = vector.broadcast %cst_15 : f32 to vector<2x4xf32>
      %c0_16 = arith.constant 0 : index
      %c0_17 = arith.constant 0 : index
      %22 = vector.load %arg7[%c0_16, %c0_17] : memref<2x4xf32, #tpu.memory_space<vmem>>, vector<2x4xf32>
      tpu.vector_store %arg7[%c0_16, %c0_17], %21 {strides = array<i32>} : memref<2x4xf32, #tpu.memory_space<vmem>>, vector<2x4xf32>,
    } else {
    }
    %c0 = arith.constant 0 : index
    %c0_4 = arith.constant 0 : index
    %8 = vector.load %arg7[%c0, %c0_4] : memref<2x4xf32, #tpu.memory_space<vmem>>, vector<2x4xf32>
    %c0_5 = arith.constant 0 : index
    %c0_6 = arith.constant 0 : index
    %c0_7 = arith.constant 0 : index
    %9 = vector.load %arg3[%c0_5, %c0_6, %c0_7] : memref<2x4x256xf32, #tpu.memory_space<vmem>>, vector<2x4x256xf32>
    %cst = arith.constant dense<0.000000e+00> : vector<2x4xf32>
    %10 = vector.multi_reduction <add>, %9, %cst [2] : vector<2x4x256xf32> to vector<2x4xf32>
    %11 = arith.addf %8, %10 : vector<2x4xf32>
    %c0_8 = arith.constant 0 : index
    %c0_9 = arith.constant 0 : index
    %12 = vector.load %arg7[%c0_8, %c0_9] : memref<2x4xf32, #tpu.memory_space<vmem>>, vector<2x4xf32>
    tpu.vector_store %arg7[%c0_8, %c0_9], %11 {strides = array<i32>} : memref<2x4xf32, #tpu.memory_space<vmem>>, vector<2x4xf32>,
    %c0_i32_10 = arith.constant 0 : i32
    %13 = arith.cmpi eq, %arg2, %c0_i32_10 : i32
    %14 = arith.extui %13 : i1 to i32
    %c0_i32_11 = arith.constant 0 : i32
    %15 = arith.cmpi ne, %14, %c0_i32_11 : i32
    scf.if %15 {
      %c0_15 = arith.constant 0 : index
      %c0_16 = arith.constant 0 : index
      %21 = vector.load %arg8[%c0_15, %c0_16] : memref<2x128xf32, #tpu.memory_space<vmem>>, vector<2x128xf32>
      %c0_17 = arith.constant 0 : index
      %c0_18 = arith.constant 0 : index
      %22 = vector.load %arg7[%c0_17, %c0_18] : memref<2x4xf32, #tpu.memory_space<vmem>>, vector<2x4xf32>
      %c0_19 = arith.constant 0 : index
      %c0_20 = arith.constant 0 : index
      %23 = vector.load %arg4[%c0_19, %c0_20] : memref<4x128xf32, #tpu.memory_space<vmem>>, vector<4x128xf32>
      %cst_21 = arith.constant dense<0.000000e+00> : vector<2x128xf32>
      %24 = tpu.matmul %22, %23, %cst_21 {dimension_numbers = #tpu.dot_dimension_numbers<[1], [0], [0], [1], [0, 0, 1, 1], [], []>} : vector<2x4xf32>, vector<4x128xf32>, vector<2x128xf32> -> vector<2x128xf32>
      %25 = arith.addf %21, %24 : vector<2x128xf32>
      %c0_22 = arith.constant 0 : index
      %c0_23 = arith.constant 0 : index
      %26 = vector.load %arg8[%c0_22, %c0_23] : memref<2x128xf32, #tpu.memory_space<vmem>>, vector<2x128xf32>
      tpu.vector_store %arg8[%c0_22, %c0_23], %25 {strides = array<i32>} : memref<2x128xf32, #tpu.memory_space<vmem>>, vector<2x128xf32>,
    } else {
    }
    %c0_i32_12 = arith.constant 0 : i32
    %16 = arith.cmpi eq, %arg1, %c0_i32_12 : i32
    %c0_i32_13 = arith.constant 0 : i32
    %17 = arith.cmpi eq, %arg2, %c0_i32_13 : i32
    %18 = arith.andi %16, %17 : i1
    %19 = arith.extui %18 : i1 to i32
    %c0_i32_14 = arith.constant 0 : i32
    %20 = arith.cmpi ne, %19, %c0_i32_14 : i32
    scf.if %20 {
      %c0_15 = arith.constant 0 : index
      %c0_16 = arith.constant 0 : index
      %21 = vector.load %arg8[%c0_15, %c0_16] : memref<2x128xf32, #tpu.memory_space<vmem>>, vector<2x128xf32>
      %c0_17 = arith.constant 0 : index
      %c0_18 = arith.constant 0 : index
      %22 = vector.load %arg5[%c0_17, %c0_18] : memref<1x128xf32, #tpu.memory_space<vmem>>, vector<1x128xf32>
      %23 = vector.broadcast %22 : vector<1x128xf32> to vector<2x128xf32>
      %24 = arith.addf %21, %23 : vector<2x128xf32>
      %c0_19 = arith.constant 0 : index
      %c0_20 = arith.constant 0 : index
      %25 = vector.load %arg6[%c0_19, %c0_20] : memref<2x128xf32, #tpu.memory_space<vmem>>, vector<2x128xf32>
      tpu.vector_store %arg6[%c0_19, %c0_20], %24 {strides = array<i32>} : memref<2x128xf32, #tpu.memory_space<vmem>>, vector<2x128xf32>,
    } else {
    }
    return
  }
  func.func @transform_0(%arg0: i32, %arg1: i32, %arg2: i32) -> (i32, i32, i32) {
    %c0_i32 = arith.constant 0 : i32
    return %arg0, %arg1, %arg2 : i32, i32, i32
  }
  func.func @transform_1(%arg0: i32, %arg1: i32, %arg2: i32) -> (i32, i32) {
    %c0_i32 = arith.constant 0 : i32
    %c0_i32_0 = arith.constant 0 : i32
    return %arg1, %c0_i32 : i32, i32
  }
  func.func @transform_2(%arg0: i32, %arg1: i32, %arg2: i32) -> (i32, i32) {
    %c0_i32 = arith.constant 0 : i32
    %c0_i32_0 = arith.constant 0 : i32
    %c0_i32_1 = arith.constant 0 : i32
    return %c0_i32, %c0_i32_0 : i32, i32
  }
  func.func @transform_3(%arg0: i32, %arg1: i32, %arg2: i32) -> (i32, i32) {
    %c0_i32 = arith.constant 0 : i32
    %c0_i32_0 = arith.constant 0 : i32
    return %arg0, %c0_i32 : i32, i32
  }
}

</mosaic_0001>

<llo_original>
// kernel: tpu_custom_call.1
$region0: #{tpu_custom_call.1}
  #allocation0 [shape = 'u32[]', space=smem, size = 0x4, offset = 0x4, fixed_abs, tag = 'smem constant byte address 0x4 - core index']
  #allocation1 [shape = 'u32[144,128]{1,0:T(1,128)}', space=vmem, size = 0x12000, scoped, tag = 'internal scratch']
  #allocation2 [shape = 'f32[2,4]{1,0:T(2,128)}', space=vmem, size = 0x400, scoped, tag = 'scratch operand']
  #allocation3 [shape = 'f32[2,128]{1,0:T(2,128)}', space=vmem, size = 0x400, scoped, tag = 'scratch operand']
  %s0 = inlined_call_operand.hbm [shape: f32[2,4,256], index: 0, kind: input, shape index: {}]
  %s1 = inlined_call_operand.hbm [shape: f32[4,128], index: 1, kind: input, shape index: {}]
  %s2 = inlined_call_operand.vmem [shape: f32[1,128], index: 2, kind: input, shape index: {}]
  %s3 = inlined_call_operand.hbm [shape: f32[2,128], index: 3, kind: output, shape index: {}]
  %s4 = sld [smem:[#allocation0]]
  $region46: #{tpu_custom_call.1} parent=0
    _
  %s6 = ssub.s32 1, %s4
  %s7 = scalar_select 0, %s6, %s4
  $region1: #{tpu_custom_call.1} parent=0
    #allocation4 [shape = 'u8[8192]{0}', space=vmem, size = 0x2000, scoped, tag = 'input window, operand 0, single buffered']
    #allocation5 [shape = 's32[1]{0}', space=sflag, size = 0x4, scoped, tag = 'scoped memory for tpu_custom_call.1']
    #allocation6 [shape = 's32[1]{0}', space=sflag, size = 0x4, scoped, tag = 'scoped memory for tpu_custom_call.1']
    #allocation7 [shape = 'u8[2048]{0}', space=vmem, size = 0x800, scoped, tag = 'input window, operand 1, single buffered']
    #allocation8 [shape = 's32[1]{0}', space=sflag, size = 0x4, scoped, tag = 'scoped memory for tpu_custom_call.1']
    #allocation9 [shape = 'u8[1024]{0}', space=vmem, size = 0x400, scoped, tag = 'output window, operand 0, single buffered']
    %8 = vsyncpa [#allocation5], 0
    %9 = vsyncpa [#allocation8], 0
    %10 = vsyncpa [#allocation6], 0
    // Predicated region
    $region2: #{tpu_custom_call.1} parent=1 // pred_check
      _
    $region3: #{tpu_custom_call.1} parent=1 // pred_check_branch
      %12 = sbr.rel (0) target = $region5
    $region4: #{tpu_custom_call.1} parent=1 // pred_region
      %s14 = ssub.s32 256, 256
      %15 = vsyncadd [#allocation5], %s14
      %s16 = sshll.u32 [#allocation4], 4
      %s17 = int_to_ptr.vmem [resolvable:$true] %s16
      %22 = dma.hbm_to_vmem [thread:$0]  %s0, 256, %s17, [#allocation5], 128, 128, 8
    $region5: #{tpu_custom_call.1} parent=1 // pred_fallthru
      _
    // Predicated region
    $region6: #{tpu_custom_call.1} parent=1 // pred_check
      _
    $region7: #{tpu_custom_call.1} parent=1 // pred_check_branch
      %24 = sbr.rel (0) target = $region9
    $region8: #{tpu_custom_call.1} parent=1 // pred_region
      %s26 = ssub.s32 64, 64
      %27 = vsyncadd [#allocation8], %s26
      %s29 = sshll.u32 [#allocation7], 4
      %s30 = int_to_ptr.vmem [resolvable:$true] %s29
      %32 = dma.hbm_to_vmem [thread:$0]  %s1, 64, %s30, [#allocation8]
    $region9: #{tpu_custom_call.1} parent=1 // pred_fallthru
      _
    // Predicated region
    $region10: #{tpu_custom_call.1} parent=1 // pred_check
      _
    $region11: #{tpu_custom_call.1} parent=1 // pred_check_branch
      %34 = sbr.rel (0) target = $region13
    $region12: #{tpu_custom_call.1} parent=1 // pred_region
      _
    $region13: #{tpu_custom_call.1} parent=1 // pred_fallthru
      _
    // Predicated region
    $region14: #{tpu_custom_call.1} parent=1 // pred_check
      _
    $region15: #{tpu_custom_call.1} parent=1 // pred_check_branch
      %36 = sbr.rel (0) target = $region17
    $region16: #{tpu_custom_call.1} parent=1 // pred_region
      %37 = dma.done [#allocation5], 256
    $region17: #{tpu_custom_call.1} parent=1 // pred_fallthru
      _
    // Predicated region
    $region18: #{tpu_custom_call.1} parent=1 // pred_check
      _
    $region19: #{tpu_custom_call.1} parent=1 // pred_check_branch
      %39 = sbr.rel (0) target = $region21
    $region20: #{tpu_custom_call.1} parent=1 // pred_region
      %40 = dma.done [#allocation8], 64
    $region21: #{tpu_custom_call.1} parent=1 // pred_fallthru
      _
    %p41 = scmp.eq.s32.totalorder 0, 0
    %p42 = scmp.eq.s32.totalorder 0, 0
    %p43 = pnand %p41, %p42
    %p44 = pneg %p43
    // Predicated region
    $region22: #{tpu_custom_call.1} parent=1 // pred_check
      _
    $region23: #{tpu_custom_call.1} parent=1 // pred_check_branch
      %46 = sbr.rel (%p43) target = $region25
    $region24: #{tpu_custom_call.1} parent=1 // pred_region
      %47 = vst [vmem:[#allocation3] sm:$0x3] 0.0
    $region25: #{tpu_custom_call.1} parent=1 // pred_fallthru
      _
    // Predicated region
    $region26: #{tpu_custom_call.1} parent=1 // pred_check
      %p48 = pneg %p42
    $region27: #{tpu_custom_call.1} parent=1 // pred_check_branch
      %50 = sbr.rel (%p48) target = $region29
    $region28: #{tpu_custom_call.1} parent=1 // pred_region
      %vm51 = vcmask 25600
      %52 = vst.msk [vmem:[#allocation2] sm:$0x3] %vm51, 0.0
    $region29: #{tpu_custom_call.1} parent=1 // pred_fallthru
      _
    %v53 = vld [vmem:[#allocation2] sm:$0x3]
    %v54 = vld [vmem:[#allocation4] sm:$0xff]
    %v55 = vld [vmem:[#allocation4 + $0x8] sm:$0xff]
    %v58 = vcombine.high %v54, %v54
    %v59 = vcombine.high %v55, %v55
    %vm62 = vcmask 1043456
    %v63 = vsel %vm62, %v54, 0.0
    %v64 = vsel %vm62, %v58, 0.0
    %v65 = vadd.f32 %v63, %v64
    %66 = vadd.xlane.f32.xlu0 %v65
    %v67 = vpop.xlane.xlu0 %66
    %v68 = vsel %vm62, %v55, 0.0
    %v69 = vsel %vm62, %v59, 0.0
    %v70 = vadd.f32 %v68, %v69
    %71 = vadd.xlane.f32.xlu0 %v70
    %v72 = vpop.xlane.xlu0 %71
    %v75 = vlaneseq
    %v76 = vand.u32 %v75, 127
    %v77 = vlaneseq
    %v78 = vshrl.u32 %v77, 7
    %v79 = vsub.s32 %v76, %v78
    %v80 = vrot.slane %v67, %v79
    %v81 = vlaneseq
    %v82 = vshrl.u32 %v81, 7
    %v83 = vsub.s32 %v76, %v82
    %v84 = vrot.slane %v72, %v83
    %vm85 = vcmask 1041409
    %v86 = vsel %vm85, %v84, %v80
    %v88 = vadd.f32 %v53, %v86
    %vm89 = vcmask 25600
    %90 = vst.msk [vmem:[#allocation2] sm:$0x3] %vm89, %v88
    // Predicated region
    $region30: #{tpu_custom_call.1} parent=1 // pred_check
      %p91 = pneg %p42
    $region31: #{tpu_custom_call.1} parent=1 // pred_check_branch
      %93 = sbr.rel (%p91) target = $region33
    $region32: #{tpu_custom_call.1} parent=1 // pred_region
      %v94 = vld [vmem:[#allocation3] sm:$0x3]
      %v95 = vld [vmem:[#allocation2] sm:$0x3]
      %v96 = vld [vmem:[#allocation7] sm:$0xf]
      %vm97 = vcmask 31744
      %v99 = vsel %vm97, %v95, 0
      %v102 = vsel %vm62, %v96, 0
      %104 = vmatprep.subr.mxu0 0.0
      %105 = vmatpush1.msra.mxu0 %v102
      %106 = vmatprep.subr.mxu0 0.0
      %107 = vmatpush1.msra.mxu0 0.0
      %108 = vmatprep.subr.mxu0 0.0
      %109 = vmatpush1.msra.mxu0 0.0
      %110 = vmatprep.subr.mxu0 0.0
      %111 = vmatpush1.msra.mxu0 0.0
      %112 = vmatprep.subr.mxu0 0.0
      %113 = vmatpush1.msra.mxu0 0.0
      %114 = vmatprep.subr.mxu0 0.0
      %115 = vmatpush1.msra.mxu0 0.0
      %116 = vmatprep.subr.mxu0 0.0
      %117 = vmatpush1.msra.mxu0 0.0
      %118 = vmatprep.subr.mxu0 0.0
      %119 = vmatpush1.msra.mxu0 0.0
      %120 = vmatprep.subr.mxu0 0.0
      %121 = vmatpush1.msra.mxu0 0.0
      %122 = vmatprep.subr.mxu0 0.0
      %123 = vmatpush1.msra.mxu0 0.0
      %124 = vmatprep.subr.mxu0 0.0
      %125 = vmatpush1.msra.mxu0 0.0
      %126 = vmatprep.subr.mxu0 0.0
      %127 = vmatpush1.msra.mxu0 0.0
      %128 = vmatprep.subr.mxu0 0.0
      %129 = vmatpush1.msra.mxu0 0.0
      %130 = vmatprep.subr.mxu0 0.0
      %131 = vmatpush1.msra.mxu0 0.0
      %132 = vmatprep.subr.mxu0 0.0
      %133 = vmatpush1.msra.mxu0 0.0
      %134 = vmatprep.subr.mxu0 0.0
      %135 = vmatpush1.msra.mxu0 0.0
      %136 = vmatprep.subr.mxu0 0.0
      %137 = vmatpush1.msra.mxu0 0.0
      %138 = vmatprep.subr.mxu0 0.0
      %139 = vmatpush1.msra.mxu0 0.0
      %140 = vmatprep.subr.mxu0 0.0
      %141 = vmatpush1.msra.mxu0 0.0
      %142 = vmatprep.subr.mxu0 0.0
      %143 = vmatpush1.msra.mxu0 0.0
      %144 = vmatprep.subr.mxu0 0.0
      %145 = vmatpush1.msra.mxu0 0.0
      %146 = vmatprep.subr.mxu0 0.0
      %147 = vmatpush1.msra.mxu0 0.0
      %148 = vmatprep.subr.mxu0 0.0
      %149 = vmatpush1.msra.mxu0 0.0
      %150 = vmatprep.subr.mxu0 0.0
      %151 = vmatpush1.msra.mxu0 0.0
      %152 = vmatprep.subr.mxu0 0.0
      %153 = vmatpush1.msra.mxu0 0.0
      %154 = vmatprep.subr.mxu0 0.0
      %155 = vmatpush1.msra.mxu0 0.0
      %156 = vmatprep.subr.mxu0 0.0
      %157 = vmatpush1.msra.mxu0 0.0
      %158 = vmatprep.subr.mxu0 0.0
      %159 = vmatpush1.msra.mxu0 0.0
      %160 = vmatprep.subr.mxu0 0.0
      %161 = vmatpush1.msra.mxu0 0.0
      %162 = vmatprep.subr.mxu0 0.0
      %163 = vmatpush1.msra.mxu0 0.0
      %164 = vmatprep.subr.mxu0 0.0
      %165 = vmatpush1.msra.mxu0 0.0
      %166 = vmatprep.subr.mxu0 0.0
      %167 = vmatpush1.msra.mxu0 0.0
      %168 = vmatprep.mubr.f32.mxu0 0.0
      %169 = vmatmul.mubr.f32.gmra.mrb[0].mxu0 %v99
      %v170 = vpop.f32.mrb[0].mxu0
      %v171 = vadd.f32 0.0, %v170
      %v172 = vpop.f32.mrb[0].mxu0
      %173 = vdwg.mxu0
      %v174 = vadd.f32 %v94, %v171
      %175 = vst [vmem:[#allocation3] sm:$0x3] %v174
    $region33: #{tpu_custom_call.1} parent=1 // pred_fallthru
      _
    // Predicated region
    $region34: #{tpu_custom_call.1} parent=1 // pred_check
      _
    $region35: #{tpu_custom_call.1} parent=1 // pred_check_branch
      %177 = sbr.rel (%p43) target = $region37
    $region36: #{tpu_custom_call.1} parent=1 // pred_region
      %v178 = vld [vmem:[#allocation3] sm:$0x3]
      %v179 = vld [vmem:[%s2] sm:$0x1]
      %v181 = vlaneseq
      %v182 = vshrl.u32 %v181, 7
      %v183 = vsub.s32 0, %v182
      %v184 = vrot.slane %v179, %v183
      %v186 = vadd.f32 %v178, %v184
      %187 = vst [vmem:[#allocation9] sm:$0x3] %v186
    $region37: #{tpu_custom_call.1} parent=1 // pred_fallthru
      _
    // Predicated region
    $region38: #{tpu_custom_call.1} parent=1 // pred_check
      _
    $region39: #{tpu_custom_call.1} parent=1 // pred_check_branch
      %189 = sbr.rel (0) target = $region41
    $region40: #{tpu_custom_call.1} parent=1 // pred_region
      %s191 = ssub.s32 32, 32
      %192 = vsyncadd [#allocation6], %s191
      %s194 = sshll.u32 [#allocation9], 4
      %s195 = int_to_ptr.vmem [resolvable:$true] %s194
      %197 = dma.vmem_to_hbm [thread:$0]  %s195, 32, %s3, [#allocation6]
    $region41: #{tpu_custom_call.1} parent=1 // pred_fallthru
      _
    // Predicated region
    $region42: #{tpu_custom_call.1} parent=1 // pred_check
      _
    $region43: #{tpu_custom_call.1} parent=1 // pred_check_branch
      %199 = sbr.rel (0) target = $region45
    $region44: #{tpu_custom_call.1} parent=1 // pred_region
      %200 = dma.done [#allocation6], 32
    $region45: #{tpu_custom_call.1} parent=1 // pred_fallthru
      _
    %201 = vsyncpa [#allocation5], 1
    %202 = vsyncpa [#allocation8], 1
    %203 = vsyncpa [#allocation6], 1

</llo_original>
